<compile_context>
chip_gen: v7x
topology: tpu7x:2x2x1
jax: 0.10.0
libtpu: 0.0.40
codegen_flags: <defaults>
</compile_context>

<pallas_src>
import functools

import jax
import jax.numpy as jnp
from jax.experimental import pallas as pl
from jax.experimental.pallas import tpu as pltpu

LANE = 128
SUBLANE = 8


def _cdiv(a, b):
    return -(-a // b)


def _round_up(n, m):
    return _cdiv(n, m) * m


def _maybe_pad(a, shape, dtype):
    """Zero-pad `a` to `shape` in `dtype`; skip the pad pass if already that shape."""
    if tuple(a.shape) == tuple(shape):
        return a if a.dtype == dtype else a.astype(dtype)
    out = jnp.zeros(shape, dtype)
    return out.at[tuple(slice(0, s) for s in a.shape)].set(a.astype(dtype))


def _vmem_budget_bytes():
    """Generation-aware VMEM request ceiling, leaving headroom below physical capacity
    for compiler scratch, semaphores and pipeline bookkeeping."""
    cap = None
    try:
        cap = int(getattr(pltpu.get_tpu_info(), "vmem_capacity_bytes", 0)) or None
    except Exception:
        cap = None
    if cap is None:
        cap = 64 << 20                      # conservative (v7x-class) default
    if cap <= (64 << 20):                   # v7x: 64 MiB physical
        return max(16 << 20, min(cap - (12 << 20), 52 << 20))
    return max(16 << 20, min(cap - (20 << 20), 104 << 20))   # v5e / v6e: 128 MiB


def _choose_tile_b(batch, max_tile):
    """Sublane-aligned batch tile that (a) keeps last-tile padding low and (b) yields
    at least 2 grid steps when the batch allows (v7x megacore sharding)."""
    b8 = _round_up(batch, SUBLANE)
    max_tile = max(SUBLANE, (max_tile // SUBLANE) * SUBLANE)
    if b8 <= SUBLANE:
        return SUBLANE, SUBLANE
    n = max(2, _cdiv(b8, max_tile))
    tile = _round_up(_cdiv(b8, n), SUBLANE)
    b_p = _round_up(b8, tile)
    return tile, b_p


def decoder_kernel(x_ref, w0_ref, b0_ref, wb_ref, bb_ref, wf_ref, bf_ref, o_ref,
                   *, num_blocks, hidden_dim, hidden_pad, compute_dtype):
    inv_h = 1.0 / hidden_dim
    needs_mask = hidden_pad > hidden_dim
    if needs_mask:
        lane_valid = jax.lax.broadcasted_iota(jnp.int32, (1, hidden_pad), 1) < hidden_dim

    def ln_relu(h):
        # One-pass LayerNorm stats (elementwise_affine=False, eps=1e-5) over the
        # zero-padded lane axis; divide by the *logical* hidden width.
        s = jnp.sum(h, axis=-1, keepdims=True)
        ss = jnp.sum(h * h, axis=-1, keepdims=True)
        mean = s * inv_h
        var = jnp.maximum(ss * inv_h - mean * mean, 0.0)
        y = (h - mean) * jax.lax.rsqrt(var + 1e-5)
        y = jnp.maximum(y, 0.0)              # ReLU; Dropout is identity in eval mode
        if needs_mask:
            y = jnp.where(lane_valid, y, 0.0)   # keep padded lanes exactly zero
        return y

    # initial_layer: Linear -> LayerNorm -> ReLU -> Dropout(identity)
    h = jnp.dot(x_ref[...], w0_ref[...], preferred_element_type=jnp.float32) + b0_ref[...]
    h = ln_relu(h)

    # residual_blocks: stacked weights, one block per iteration (bounds live ranges).
    def block(i, h):
        hi = jnp.dot(h.astype(compute_dtype), wb_ref[i],
                     preferred_element_type=jnp.float32) + bb_ref[i]
        return ln_relu(hi)

    h = jax.lax.fori_loop(0, num_blocks, block, h,
                          unroll=True if num_blocks <= 8 else 2)

    # final_layer: plain Linear
    out = jnp.dot(h.astype(compute_dtype), wf_ref[...],
                  preferred_element_type=jnp.float32) + bf_ref[...]
    o_ref[...] = out.astype(o_ref.dtype)


def custom_decoder(x, params, num_blocks, *, max_tile_b=512, compute_dtype=jnp.bfloat16):
    """params: w0,b0 (initial), wb/bb (lists of length num_blocks), wf, bf.
    Weights stored PyTorch-style (out, in); biases (out,)."""
    assert num_blocks >= 1
    B, input_dim = x.shape
    hidden_dim = params["w0"].shape[0]
    output_dim = params["wf"].shape[0]

    # Lane-dense (multiple-of-128) feature dims.
    in_p = _round_up(input_dim, LANE)
    h_p = _round_up(hidden_dim, LANE)
    out_p = _round_up(output_dim, LANE)

    # Resident (single-buffered) weight/bias footprint.
    wbytes = 2 * (in_p * h_p + num_blocks * h_p * h_p + h_p * out_p)   # bf16 weights
    bbytes = 4 * ((num_blocks + 1) * h_p + out_p)                      # f32 biases

    budget = _vmem_budget_bytes()

    # Batch tile bounded by what remains of the VMEM budget after resident weights.
    per_row = 2 * in_p * 2 + 2 * out_p * 4 + 6 * h_p * 4   # x/out double-buffers + f32 temps
    avail = budget - (wbytes + bbytes + (6 << 20))
    if avail > 0:
        max_tile_b = min(max_tile_b, max(SUBLANE, (avail // per_row) // SUBLANE * SUBLANE))
    else:
        # Weights alone exceed the budget — see TODO(synk) at top about HBM streaming.
        max_tile_b = SUBLANE

    tile_b, b_p = _choose_tile_b(B, max_tile_b)
    grid = (b_p // tile_b,)

    # Pre-transpose weights to (in, out), pad with zeros, cast matmul operands to bf16.
    x_p = _maybe_pad(x, (b_p, in_p), compute_dtype)
    w0_p = _maybe_pad(params["w0"].T, (in_p, h_p), compute_dtype)
    b0_p = _maybe_pad(params["b0"].reshape(1, -1), (1, h_p), jnp.float32)
    wb = jnp.stack([w.T for w in params["wb"]])                # (nb, hidden, hidden)
    bb = jnp.stack([b.reshape(1, -1) for b in params["bb"]])   # (nb, 1, hidden)
    wb_p = _maybe_pad(wb, (num_blocks, h_p, h_p), compute_dtype)
    bb_p = _maybe_pad(bb, (num_blocks, 1, h_p), jnp.float32)
    wf_p = _maybe_pad(params["wf"].T, (h_p, out_p), compute_dtype)
    bf_p = _maybe_pad(params["bf"].reshape(1, -1), (1, out_p), jnp.float32)

    # Explicit VMEM request: single-buffered weights + double-buffered activation tiles
    # + f32 temporaries + headroom, clamped to the generation-aware budget.
    abytes = 2 * tile_b * in_p * 2      # x tile, bf16, 2 buffers
    obytes = 2 * tile_b * out_p * 4     # out tile, f32, 2 buffers
    tbytes = 6 * tile_b * h_p * 4       # in-kernel f32 temporaries
    vmem_limit = int(min(max(wbytes + bbytes + abytes + obytes + tbytes + (4 << 20),
                             16 << 20), budget))

    kernel = functools.partial(decoder_kernel, num_blocks=num_blocks,
                               hidden_dim=float(hidden_dim), hidden_pad=h_p,
                               compute_dtype=compute_dtype)

    resident = pl.Buffered(1)   # constant index_map -> no double-buffering needed

    out_padded = pl.pallas_call(
        kernel,
        out_shape=jax.ShapeDtypeStruct((b_p, out_p), jnp.float32),
        grid=grid,
        in_specs=[
            pl.BlockSpec((tile_b, in_p), lambda i: (i, 0)),                 # x: batch-tiled
            pl.BlockSpec((in_p, h_p), lambda i: (0, 0), pipeline_mode=resident),
            pl.BlockSpec((1, h_p), lambda i: (0, 0), pipeline_mode=resident),
            pl.BlockSpec((num_blocks, h_p, h_p), lambda i: (0, 0, 0), pipeline_mode=resident),
            pl.BlockSpec((num_blocks, 1, h_p), lambda i: (0, 0, 0), pipeline_mode=resident),
            pl.BlockSpec((h_p, out_p), lambda i: (0, 0), pipeline_mode=resident),
            pl.BlockSpec((1, out_p), lambda i: (0, 0), pipeline_mode=resident),
        ],
        out_specs=pl.BlockSpec((tile_b, out_p), lambda i: (i, 0)),
        compiler_params=pltpu.CompilerParams(
            dimension_semantics=("parallel",),
            vmem_limit_bytes=vmem_limit,
        ),
    )(x_p, w0_p, b0_p, wb_p, bb_p, wf_p, bf_p)

    return out_padded[:B, :output_dim]


def init_params(key, input_dim, hidden_dim, output_dim, num_blocks):
    keys = jax.random.split(key, 2 * (num_blocks + 2))
    k = iter(keys)
    scale = 0.1
    params = {
        "w0": scale * jax.random.normal(next(k), (hidden_dim, input_dim), jnp.float32),
        "b0": scale * jax.random.normal(next(k), (hidden_dim,), jnp.float32),
        "wb": [],
        "bb": [],
    }
    for _ in range(num_blocks):
        params["wb"].append(scale * jax.random.normal(next(k), (hidden_dim, hidden_dim), jnp.float32))
        params["bb"].append(scale * jax.random.normal(next(k), (hidden_dim,), jnp.float32))
    params["wf"] = scale * jax.random.normal(next(k), (output_dim, hidden_dim), jnp.float32)
    params["bf"] = scale * jax.random.normal(next(k), (output_dim,), jnp.float32)
    return params


def _layernorm_ref(x, eps=1e-5):
    mean = jnp.mean(x, axis=-1, keepdims=True)
    var = jnp.mean((x - mean) ** 2, axis=-1, keepdims=True)
    return (x - mean) * jax.lax.rsqrt(var + eps)


def reference_decoder_f32(x, params):
    """Pure-f32 JAX reference matching the PyTorch forward (eval mode)."""
    h = jnp.maximum(_layernorm_ref(x @ params["w0"].T + params["b0"]), 0.0)
    for w, b in zip(params["wb"], params["bb"]):
        h = jnp.maximum(_layernorm_ref(h @ w.T + b), 0.0)
    return h @ params["wf"].T + params["bf"]


def reference_decoder_mixed(x, params, compute_dtype=jnp.bfloat16):
    """Same forward with the kernel's precision policy (bf16 matmul inputs, f32 accum/LN)."""
    def lin(a, w, b):
        return jnp.dot(a.astype(compute_dtype), w.T.astype(compute_dtype),
                       preferred_element_type=jnp.float32) + b
    h = jnp.maximum(_layernorm_ref(lin(x, params["w0"], params["b0"])), 0.0)
    for w, b in zip(params["wb"], params["bb"]):
        h = jnp.maximum(_layernorm_ref(lin(h, w, b)), 0.0)
    return lin(h, params["wf"], params["bf"])


if __name__ == "__main__":
    input_dim, hidden_dim, output_dim, num_blocks = 16, 32, 16, 2
    batch = 8

    key = jax.random.PRNGKey(0)
    kx, kp = jax.random.split(key)
    x = jax.random.normal(kx, (batch, input_dim), jnp.float32)
    params = init_params(kp, input_dim, hidden_dim, output_dim, num_blocks)

    out = jax.block_until_ready(custom_decoder(x, params, num_blocks))
    assert out.shape == (batch, output_dim)

    # Tight check vs a reference using the same precision policy as the kernel.
    ref_mixed = reference_decoder_mixed(x, params)
    assert jnp.allclose(out, ref_mixed, atol=5e-4, rtol=5e-4), "mismatch vs mixed-precision reference"

    # Semantic check vs the pure-f32 (PyTorch-equivalent) forward; tolerance reflects
    # bf16 matmul inputs.
    ref_f32 = reference_decoder_f32(x, params)
    assert jnp.allclose(out, ref_f32, atol=1e-1, rtol=1e-1), "mismatch vs f32 reference"

    print("KERNEL_OK")
</pallas_src>

<mosaic_0001>
module attributes {stable_mosaic.version = 11 : i64} {
  func.func @decoder_kernel(%arg0: i32, %arg1: memref<8x128xbf16, #tpu.memory_space<vmem>>, %arg2: memref<128x128xbf16, #tpu.memory_space<vmem>>, %arg3: memref<1x128xf32, #tpu.memory_space<vmem>>, %arg4: memref<2x128x128xbf16, #tpu.memory_space<vmem>>, %arg5: memref<2x1x128xf32, #tpu.memory_space<vmem>>, %arg6: memref<128x128xbf16, #tpu.memory_space<vmem>>, %arg7: memref<1x128xf32, #tpu.memory_space<vmem>>, %arg8: memref<8x128xf32, #tpu.memory_space<vmem>>) attributes {dimension_semantics = [#tpu.dimension_semantics<parallel>], iteration_bounds = array<i64: 1>, scalar_prefetch = 0 : i64, scratch_operands = 0 : i64, tpu.core_type = #tpu.core_type<tc>, window_params = [{transform_indices = @transform_0, window_bounds = array<i64: 8, 128>}, {pipeline_mode = #tpu.pipeline_mode<synchronous>, transform_indices = @transform_1, window_bounds = array<i64: 128, 128>}, {pipeline_mode = #tpu.pipeline_mode<synchronous>, transform_indices = @transform_2, window_bounds = array<i64: 1, 128>}, {pipeline_mode = #tpu.pipeline_mode<synchronous>, transform_indices = @transform_3, window_bounds = array<i64: 2, 128, 128>}, {pipeline_mode = #tpu.pipeline_mode<synchronous>, transform_indices = @transform_4, window_bounds = array<i64: 2, 1, 128>}, {pipeline_mode = #tpu.pipeline_mode<synchronous>, transform_indices = @transform_5, window_bounds = array<i64: 128, 128>}, {pipeline_mode = #tpu.pipeline_mode<synchronous>, transform_indices = @transform_6, window_bounds = array<i64: 1, 128>}, {transform_indices = @transform_7, window_bounds = array<i64: 8, 128>}]} {
    %0 = tpu.iota {dimensions = array<i32: 1>} : vector<1x128xi32>
    %1 = arith.sitofp %0 : vector<1x128xi32> to vector<1x128xf32>
    %cst = arith.constant 3.200000e+01 : f32
    %2 = vector.broadcast %cst : f32 to vector<1x128xf32>
    %3 = arith.cmpf olt, %1, %2 : vector<1x128xf32>
    %c0 = arith.constant 0 : index
    %c0_0 = arith.constant 0 : index
    %4 = vector.load %arg1[%c0, %c0_0] : memref<8x128xbf16, #tpu.memory_space<vmem>>, vector<8x128xbf16>
    %c0_1 = arith.constant 0 : index
    %c0_2 = arith.constant 0 : index
    %5 = vector.load %arg2[%c0_1, %c0_2] : memref<128x128xbf16, #tpu.memory_space<vmem>>, vector<128x128xbf16>
    %cst_3 = arith.constant dense<0.000000e+00> : vector<8x128xf32>
    %6 = tpu.matmul %4, %5, %cst_3 {dimension_numbers = #tpu.dot_dimension_numbers<[1], [0], [0], [1], [0, 0, 1, 1], [], []>} : vector<8x128xbf16>, vector<128x128xbf16>, vector<8x128xf32> -> vector<8x128xf32>
    %c0_4 = arith.constant 0 : index
    %c0_5 = arith.constant 0 : index
    %7 = vector.load %arg3[%c0_4, %c0_5] : memref<1x128xf32, #tpu.memory_space<vmem>>, vector<1x128xf32>
    %8 = vector.broadcast %7 : vector<1x128xf32> to vector<8x128xf32>
    %9 = arith.addf %6, %8 : vector<8x128xf32>
    %cst_6 = arith.constant dense<0.000000e+00> : vector<8xf32>
    %10 = vector.multi_reduction <add>, %9, %cst_6 [1] : vector<8x128xf32> to vector<8xf32>
    %11 = vector.shape_cast %10 : vector<8xf32> to vector<8x1xf32>
    %12 = arith.mulf %9, %9 : vector<8x128xf32>
    %cst_7 = arith.constant dense<0.000000e+00> : vector<8xf32>
    %13 = vector.multi_reduction <add>, %12, %cst_7 [1] : vector<8x128xf32> to vector<8xf32>
    %14 = vector.shape_cast %13 : vector<8xf32> to vector<8x1xf32>
    %cst_8 = arith.constant 3.125000e-02 : f32
    %15 = vector.broadcast %cst_8 : f32 to vector<8x1xf32>
    %16 = arith.mulf %11, %15 : vector<8x1xf32>
    %cst_9 = arith.constant 3.125000e-02 : f32
    %17 = vector.broadcast %cst_9 : f32 to vector<8x1xf32>
    %18 = arith.mulf %14, %17 : vector<8x1xf32>
    %19 = arith.mulf %16, %16 : vector<8x1xf32>
    %20 = arith.subf %18, %19 : vector<8x1xf32>
    %cst_10 = arith.constant 0.000000e+00 : f32
    %21 = vector.broadcast %cst_10 : f32 to vector<8x1xf32>
    %22 = arith.maximumf %20, %21 : vector<8x1xf32>
    %23 = vector.broadcast %16 : vector<8x1xf32> to vector<8x128xf32>
    %24 = arith.subf %9, %23 : vector<8x128xf32>
    %cst_11 = arith.constant 9.99999974E-6 : f32
    %25 = vector.broadcast %cst_11 : f32 to vector<8x1xf32>
    %26 = arith.addf %22, %25 : vector<8x1xf32>
    %27 = math.rsqrt %26 : vector<8x1xf32>
    %28 = vector.broadcast %27 : vector<8x1xf32> to vector<8x128xf32>
    %29 = arith.mulf %24, %28 : vector<8x128xf32>
    %cst_12 = arith.constant 0.000000e+00 : f32
    %30 = vector.broadcast %cst_12 : f32 to vector<8x128xf32>
    %31 = arith.maximumf %29, %30 : vector<8x128xf32>
    %cst_13 = arith.constant 0.000000e+00 : f32
    %32 = vector.shape_cast %3 : vector<1x128xi1> to vector<1x128xi1>
    %33 = vector.broadcast %32 : vector<1x128xi1> to vector<8x128xi1>
    %34 = vector.broadcast %cst_13 : f32 to vector<8x128xf32>
    %35 = arith.select %33, %31, %34 : vector<8x128xi1>, vector<8x128xf32>
    %c0_i32 = arith.constant 0 : i32
    %36 = arith.truncf %35 : vector<8x128xf32> to vector<8x128xbf16>
    %37 = arith.index_cast %c0_i32 : i32 to index
    %c0_14 = arith.constant 0 : index
    %c0_15 = arith.constant 0 : index
    %38 = vector.load %arg4[%37, %c0_14, %c0_15] : memref<2x128x128xbf16, #tpu.memory_space<vmem>>, vector<1x128x128xbf16>
    %39 = vector.shape_cast %38 : vector<1x128x128xbf16> to vector<128x128xbf16>
    %cst_16 = arith.constant dense<0.000000e+00> : vector<8x128xf32>
    %40 = tpu.matmul %36, %39, %cst_16 {dimension_numbers = #tpu.dot_dimension_numbers<[1], [0], [0], [1], [0, 0, 1, 1], [], []>} : vector<8x128xbf16>, vector<128x128xbf16>, vector<8x128xf32> -> vector<8x128xf32>
    %41 = arith.index_cast %c0_i32 : i32 to index
    %c0_17 = arith.constant 0 : index
    %c0_18 = arith.constant 0 : index
    %42 = vector.load %arg5[%41, %c0_17, %c0_18] : memref<2x1x128xf32, #tpu.memory_space<vmem>>, vector<1x1x128xf32>
    %43 = vector.shape_cast %42 : vector<1x1x128xf32> to vector<1x128xf32>
    %44 = vector.broadcast %43 : vector<1x128xf32> to vector<8x128xf32>
    %45 = arith.addf %40, %44 : vector<8x128xf32>
    %cst_19 = arith.constant dense<0.000000e+00> : vector<8xf32>
    %46 = vector.multi_reduction <add>, %45, %cst_19 [1] : vector<8x128xf32> to vector<8xf32>
    %47 = vector.shape_cast %46 : vector<8xf32> to vector<8x1xf32>
    %48 = arith.mulf %45, %45 : vector<8x128xf32>
    %cst_20 = arith.constant dense<0.000000e+00> : vector<8xf32>
    %49 = vector.multi_reduction <add>, %48, %cst_20 [1] : vector<8x128xf32> to vector<8xf32>
    %50 = vector.shape_cast %49 : vector<8xf32> to vector<8x1xf32>
    %cst_21 = arith.constant 3.125000e-02 : f32
    %51 = vector.broadcast %cst_21 : f32 to vector<8x1xf32>
    %52 = arith.mulf %47, %51 : vector<8x1xf32>
    %cst_22 = arith.constant 3.125000e-02 : f32
    %53 = vector.broadcast %cst_22 : f32 to vector<8x1xf32>
    %54 = arith.mulf %50, %53 : vector<8x1xf32>
    %55 = arith.mulf %52, %52 : vector<8x1xf32>
    %56 = arith.subf %54, %55 : vector<8x1xf32>
    %cst_23 = arith.constant 0.000000e+00 : f32
    %57 = vector.broadcast %cst_23 : f32 to vector<8x1xf32>
    %58 = arith.maximumf %56, %57 : vector<8x1xf32>
    %59 = vector.broadcast %52 : vector<8x1xf32> to vector<8x128xf32>
    %60 = arith.subf %45, %59 : vector<8x128xf32>
    %cst_24 = arith.constant 9.99999974E-6 : f32
    %61 = vector.broadcast %cst_24 : f32 to vector<8x1xf32>
    %62 = arith.addf %58, %61 : vector<8x1xf32>
    %63 = math.rsqrt %62 : vector<8x1xf32>
    %64 = vector.broadcast %63 : vector<8x1xf32> to vector<8x128xf32>
    %65 = arith.mulf %60, %64 : vector<8x128xf32>
    %cst_25 = arith.constant 0.000000e+00 : f32
    %66 = vector.broadcast %cst_25 : f32 to vector<8x128xf32>
    %67 = arith.maximumf %65, %66 : vector<8x128xf32>
    %cst_26 = arith.constant 0.000000e+00 : f32
    %68 = vector.shape_cast %3 : vector<1x128xi1> to vector<1x128xi1>
    %69 = vector.broadcast %68 : vector<1x128xi1> to vector<8x128xi1>
    %70 = vector.broadcast %cst_26 : f32 to vector<8x128xf32>
    %71 = arith.select %69, %67, %70 : vector<8x128xi1>, vector<8x128xf32>
    %c1_i32 = arith.constant 1 : i32
    %72 = arith.truncf %71 : vector<8x128xf32> to vector<8x128xbf16>
    %73 = arith.index_cast %c1_i32 : i32 to index
    %c0_27 = arith.constant 0 : index
    %c0_28 = arith.constant 0 : index
    %74 = vector.load %arg4[%73, %c0_27, %c0_28] : memref<2x128x128xbf16, #tpu.memory_space<vmem>>, vector<1x128x128xbf16>
    %75 = vector.shape_cast %74 : vector<1x128x128xbf16> to vector<128x128xbf16>
    %cst_29 = arith.constant dense<0.000000e+00> : vector<8x128xf32>
    %76 = tpu.matmul %72, %75, %cst_29 {dimension_numbers = #tpu.dot_dimension_numbers<[1], [0], [0], [1], [0, 0, 1, 1], [], []>} : vector<8x128xbf16>, vector<128x128xbf16>, vector<8x128xf32> -> vector<8x128xf32>
    %77 = arith.index_cast %c1_i32 : i32 to index
    %c0_30 = arith.constant 0 : index
    %c0_31 = arith.constant 0 : index
    %78 = vector.load %arg5[%77, %c0_30, %c0_31] : memref<2x1x128xf32, #tpu.memory_space<vmem>>, vector<1x1x128xf32>
    %79 = vector.shape_cast %78 : vector<1x1x128xf32> to vector<1x128xf32>
    %80 = vector.broadcast %79 : vector<1x128xf32> to vector<8x128xf32>
    %81 = arith.addf %76, %80 : vector<8x128xf32>
    %cst_32 = arith.constant dense<0.000000e+00> : vector<8xf32>
    %82 = vector.multi_reduction <add>, %81, %cst_32 [1] : vector<8x128xf32> to vector<8xf32>
    %83 = vector.shape_cast %82 : vector<8xf32> to vector<8x1xf32>
    %84 = arith.mulf %81, %81 : vector<8x128xf32>
    %cst_33 = arith.constant dense<0.000000e+00> : vector<8xf32>
    %85 = vector.multi_reduction <add>, %84, %cst_33 [1] : vector<8x128xf32> to vector<8xf32>
    %86 = vector.shape_cast %85 : vector<8xf32> to vector<8x1xf32>
    %cst_34 = arith.constant 3.125000e-02 : f32
    %87 = vector.broadcast %cst_34 : f32 to vector<8x1xf32>
    %88 = arith.mulf %83, %87 : vector<8x1xf32>
    %cst_35 = arith.constant 3.125000e-02 : f32
    %89 = vector.broadcast %cst_35 : f32 to vector<8x1xf32>
    %90 = arith.mulf %86, %89 : vector<8x1xf32>
    %91 = arith.mulf %88, %88 : vector<8x1xf32>
    %92 = arith.subf %90, %91 : vector<8x1xf32>
    %cst_36 = arith.constant 0.000000e+00 : f32
    %93 = vector.broadcast %cst_36 : f32 to vector<8x1xf32>
    %94 = arith.maximumf %92, %93 : vector<8x1xf32>
    %95 = vector.broadcast %88 : vector<8x1xf32> to vector<8x128xf32>
    %96 = arith.subf %81, %95 : vector<8x128xf32>
    %cst_37 = arith.constant 9.99999974E-6 : f32
    %97 = vector.broadcast %cst_37 : f32 to vector<8x1xf32>
    %98 = arith.addf %94, %97 : vector<8x1xf32>
    %99 = math.rsqrt %98 : vector<8x1xf32>
    %100 = vector.broadcast %99 : vector<8x1xf32> to vector<8x128xf32>
    %101 = arith.mulf %96, %100 : vector<8x128xf32>
    %cst_38 = arith.constant 0.000000e+00 : f32
    %102 = vector.broadcast %cst_38 : f32 to vector<8x128xf32>
    %103 = arith.maximumf %101, %102 : vector<8x128xf32>
    %cst_39 = arith.constant 0.000000e+00 : f32
    %104 = vector.shape_cast %3 : vector<1x128xi1> to vector<1x128xi1>
    %105 = vector.broadcast %104 : vector<1x128xi1> to vector<8x128xi1>
    %106 = vector.broadcast %cst_39 : f32 to vector<8x128xf32>
    %107 = arith.select %105, %103, %106 : vector<8x128xi1>, vector<8x128xf32>
    %c2_i32 = arith.constant 2 : i32
    %108 = arith.truncf %107 : vector<8x128xf32> to vector<8x128xbf16>
    %c0_40 = arith.constant 0 : index
    %c0_41 = arith.constant 0 : index
    %109 = vector.load %arg6[%c0_40, %c0_41] : memref<128x128xbf16, #tpu.memory_space<vmem>>, vector<128x128xbf16>
    %cst_42 = arith.constant dense<0.000000e+00> : vector<8x128xf32>
    %110 = tpu.matmul %108, %109, %cst_42 {dimension_numbers = #tpu.dot_dimension_numbers<[1], [0], [0], [1], [0, 0, 1, 1], [], []>} : vector<8x128xbf16>, vector<128x128xbf16>, vector<8x128xf32> -> vector<8x128xf32>
    %c0_43 = arith.constant 0 : index
    %c0_44 = arith.constant 0 : index
    %111 = vector.load %arg7[%c0_43, %c0_44] : memref<1x128xf32, #tpu.memory_space<vmem>>, vector<1x128xf32>
    %112 = vector.broadcast %111 : vector<1x128xf32> to vector<8x128xf32>
    %113 = arith.addf %110, %112 : vector<8x128xf32>
    %c0_45 = arith.constant 0 : index
    %c0_46 = arith.constant 0 : index
    %114 = vector.load %arg8[%c0_45, %c0_46] : memref<8x128xf32, #tpu.memory_space<vmem>>, vector<8x128xf32>
    tpu.vector_store %arg8[%c0_45, %c0_46], %113 {strides = array<i32>} : memref<8x128xf32, #tpu.memory_space<vmem>>, vector<8x128xf32>,
    return
  }
  func.func @transform_0(%arg0: i32) -> (i32, i32) {
    %c0_i32 = arith.constant 0 : i32
    %c0_i32_0 = arith.constant 0 : i32
    return %arg0, %c0_i32 : i32, i32
  }
  func.func @transform_1(%arg0: i32) -> (i32, i32) {
    %c0_i32 = arith.constant 0 : i32
    %c0_i32_0 = arith.constant 0 : i32
    %c0_i32_1 = arith.constant 0 : i32
    return %c0_i32, %c0_i32_0 : i32, i32
  }
  func.func @transform_2(%arg0: i32) -> (i32, i32) {
    %c0_i32 = arith.constant 0 : i32
    %c0_i32_0 = arith.constant 0 : i32
    %c0_i32_1 = arith.constant 0 : i32
    return %c0_i32, %c0_i32_0 : i32, i32
  }
  func.func @transform_3(%arg0: i32) -> (i32, i32, i32) {
    %c0_i32 = arith.constant 0 : i32
    %c0_i32_0 = arith.constant 0 : i32
    %c0_i32_1 = arith.constant 0 : i32
    %c0_i32_2 = arith.constant 0 : i32
    return %c0_i32, %c0_i32_0, %c0_i32_1 : i32, i32, i32
  }
  func.func @transform_4(%arg0: i32) -> (i32, i32, i32) {
    %c0_i32 = arith.constant 0 : i32
    %c0_i32_0 = arith.constant 0 : i32
    %c0_i32_1 = arith.constant 0 : i32
    %c0_i32_2 = arith.constant 0 : i32
    return %c0_i32, %c0_i32_0, %c0_i32_1 : i32, i32, i32
  }
  func.func @transform_5(%arg0: i32) -> (i32, i32) {
    %c0_i32 = arith.constant 0 : i32
    %c0_i32_0 = arith.constant 0 : i32
    %c0_i32_1 = arith.constant 0 : i32
    return %c0_i32, %c0_i32_0 : i32, i32
  }
  func.func @transform_6(%arg0: i32) -> (i32, i32) {
    %c0_i32 = arith.constant 0 : i32
    %c0_i32_0 = arith.constant 0 : i32
    %c0_i32_1 = arith.constant 0 : i32
    return %c0_i32, %c0_i32_0 : i32, i32
  }
  func.func @transform_7(%arg0: i32) -> (i32, i32) {
    %c0_i32 = arith.constant 0 : i32
    %c0_i32_0 = arith.constant 0 : i32
    return %arg0, %c0_i32 : i32, i32
  }
}

</mosaic_0001>

<llo_original>
// kernel: tpu_custom_call.1
$region0: #{tpu_custom_call.1}
  #allocation0 [shape = 'u32[]', space=smem, size = 0x4, offset = 0x4, fixed_abs, tag = 'smem constant byte address 0x4 - core index']
  #allocation1 [shape = 'u32[144,128]{1,0:T(1,128)}', space=vmem, size = 0x12000, scoped, tag = 'internal scratch']
  %s0 = inlined_call_operand.hbm [shape: bf16[8,128], index: 0, kind: input, shape index: {}]
  %s1 = inlined_call_operand.hbm [shape: bf16[128,128], index: 1, kind: input, shape index: {}]
  %s2 = inlined_call_operand.vmem [shape: f32[1,128], index: 2, kind: input, shape index: {}]
  %s3 = inlined_call_operand.hbm [shape: bf16[2,128,128], index: 3, kind: input, shape index: {}]
  %s4 = inlined_call_operand.vmem [shape: f32[2,1,128], index: 4, kind: input, shape index: {}]
  %s5 = inlined_call_operand.hbm [shape: bf16[128,128], index: 5, kind: input, shape index: {}]
  %s6 = inlined_call_operand.vmem [shape: f32[1,128], index: 6, kind: input, shape index: {}]
  %s7 = inlined_call_operand.hbm [shape: f32[8,128], index: 7, kind: output, shape index: {}]
  %s8 = sld [smem:[#allocation0]]
  $region54: #{tpu_custom_call.1} parent=0
    _
  %s10 = ssub.s32 1, %s8
  %s11 = scalar_select 0, %s10, %s8
  $region1: #{tpu_custom_call.1} parent=0
    #allocation2 [shape = 'u8[2048]{0}', space=vmem, size = 0x800, scoped, tag = 'input window, operand 0, single buffered']
    #allocation3 [shape = 's32[1]{0}', space=sflag, size = 0x4, scoped, tag = 'scoped memory for tpu_custom_call.1']
    #allocation4 [shape = 's32[1]{0}', space=sflag, size = 0x4, scoped, tag = 'scoped memory for tpu_custom_call.1']
    #allocation5 [shape = 'u8[32768]{0}', space=vmem, size = 0x8000, scoped, tag = 'input window, operand 1, single buffered']
    #allocation6 [shape = 's32[1]{0}', space=sflag, size = 0x4, scoped, tag = 'scoped memory for tpu_custom_call.1']
    #allocation7 [shape = 'u8[65536]{0}', space=vmem, size = 0x10000, scoped, tag = 'input window, operand 3, single buffered']
    #allocation8 [shape = 'u8[32768]{0}', space=vmem, size = 0x8000, scoped, tag = 'input window, operand 5, single buffered']
    #allocation9 [shape = 's32[1]{0}', space=sflag, size = 0x4, scoped, tag = 'scoped memory for tpu_custom_call.1']
    #allocation10 [shape = 'u8[4096]{0}', space=vmem, size = 0x1000, scoped, tag = 'output window, operand 0, single buffered']
    %12 = vsyncpa [#allocation3], 0
    %13 = vsyncpa [#allocation6], 0
    %14 = vsyncpa [#allocation9], 0
    %15 = vsyncpa [#allocation4], 0
    // Predicated region
    $region2: #{tpu_custom_call.1} parent=1 // pred_check
      _
    $region3: #{tpu_custom_call.1} parent=1 // pred_check_branch
      %17 = sbr.rel (0) target = $region5
    $region4: #{tpu_custom_call.1} parent=1 // pred_region
      %s19 = ssub.s32 64, 64
      %20 = vsyncadd [#allocation3], %s19
      %s22 = sshll.u32 [#allocation2], 4
      %s23 = int_to_ptr.vmem [resolvable:$true] %s22
      %25 = dma.hbm_to_vmem [thread:$0]  %s0, 64, %s23, [#allocation3]
    $region5: #{tpu_custom_call.1} parent=1 // pred_fallthru
      _
    // Predicated region
    $region6: #{tpu_custom_call.1} parent=1 // pred_check
      _
    $region7: #{tpu_custom_call.1} parent=1 // pred_check_branch
      %27 = sbr.rel (0) target = $region9
    $region8: #{tpu_custom_call.1} parent=1 // pred_region
      %s29 = ssub.s32 1024, 1024
      %30 = vsyncadd [#allocation6], %s29
      %s31 = sshll.u32 [#allocation5], 4
      %s32 = int_to_ptr.vmem [resolvable:$true] %s31
      %37 = dma.hbm_to_vmem [thread:$0]  %s1, 1024, %s32, [#allocation6], 64, 64, 4
    $region9: #{tpu_custom_call.1} parent=1 // pred_fallthru
      _
    // Predicated region
    $region10: #{tpu_custom_call.1} parent=1 // pred_check
      _
    $region11: #{tpu_custom_call.1} parent=1 // pred_check_branch
      %39 = sbr.rel (0) target = $region13
    $region12: #{tpu_custom_call.1} parent=1 // pred_region
      _
    $region13: #{tpu_custom_call.1} parent=1 // pred_fallthru
      _
    // Predicated region
    $region14: #{tpu_custom_call.1} parent=1 // pred_check
      _
    $region15: #{tpu_custom_call.1} parent=1 // pred_check_branch
      %41 = sbr.rel (0) target = $region17
    $region16: #{tpu_custom_call.1} parent=1 // pred_region
      %s43 = ssub.s32 2048, 2048
      %44 = vsyncadd [#allocation6], %s43
      %s45 = sshll.u32 [#allocation7], 4
      %s46 = int_to_ptr.vmem [resolvable:$true] %s45
      %51 = dma.hbm_to_vmem [thread:$0]  %s3, 2048, %s46, [#allocation6], 64, 64, 4
    $region17: #{tpu_custom_call.1} parent=1 // pred_fallthru
      _
    // Predicated region
    $region18: #{tpu_custom_call.1} parent=1 // pred_check
      _
    $region19: #{tpu_custom_call.1} parent=1 // pred_check_branch
      %53 = sbr.rel (0) target = $region21
    $region20: #{tpu_custom_call.1} parent=1 // pred_region
      _
    $region21: #{tpu_custom_call.1} parent=1 // pred_fallthru
      _
    // Predicated region
    $region22: #{tpu_custom_call.1} parent=1 // pred_check
      _
    $region23: #{tpu_custom_call.1} parent=1 // pred_check_branch
      %55 = sbr.rel (0) target = $region25
    $region24: #{tpu_custom_call.1} parent=1 // pred_region
      %s57 = ssub.s32 1024, 1024
      %58 = vsyncadd [#allocation9], %s57
      %s59 = sshll.u32 [#allocation8], 4
      %s60 = int_to_ptr.vmem [resolvable:$true] %s59
      %65 = dma.hbm_to_vmem [thread:$0]  %s5, 1024, %s60, [#allocation9], 64, 64, 4
    $region25: #{tpu_custom_call.1} parent=1 // pred_fallthru
      _
    // Predicated region
    $region26: #{tpu_custom_call.1} parent=1 // pred_check
      _
    $region27: #{tpu_custom_call.1} parent=1 // pred_check_branch
      %67 = sbr.rel (0) target = $region29
    $region28: #{tpu_custom_call.1} parent=1 // pred_region
      _
    $region29: #{tpu_custom_call.1} parent=1 // pred_fallthru
      _
    // Predicated region
    $region30: #{tpu_custom_call.1} parent=1 // pred_check
      _
    $region31: #{tpu_custom_call.1} parent=1 // pred_check_branch
      %69 = sbr.rel (0) target = $region33
    $region32: #{tpu_custom_call.1} parent=1 // pred_region
      %70 = dma.done [#allocation3], 64
    $region33: #{tpu_custom_call.1} parent=1 // pred_fallthru
      _
    // Predicated region
    $region34: #{tpu_custom_call.1} parent=1 // pred_check
      _
    $region35: #{tpu_custom_call.1} parent=1 // pred_check_branch
      %72 = sbr.rel (0) target = $region37
    $region36: #{tpu_custom_call.1} parent=1 // pred_region
      %73 = dma.done [#allocation6], 1024
    $region37: #{tpu_custom_call.1} parent=1 // pred_fallthru
      _
    // Predicated region
    $region38: #{tpu_custom_call.1} parent=1 // pred_check
      _
    $region39: #{tpu_custom_call.1} parent=1 // pred_check_branch
      %75 = sbr.rel (0) target = $region41
    $region40: #{tpu_custom_call.1} parent=1 // pred_region
      %76 = dma.done [#allocation6], 2048
    $region41: #{tpu_custom_call.1} parent=1 // pred_fallthru
      _
    // Predicated region
    $region42: #{tpu_custom_call.1} parent=1 // pred_check
      _
    $region43: #{tpu_custom_call.1} parent=1 // pred_check_branch
      %78 = sbr.rel (0) target = $region45
    $region44: #{tpu_custom_call.1} parent=1 // pred_region
      %79 = dma.done [#allocation9], 1024
    $region45: #{tpu_custom_call.1} parent=1 // pred_fallthru
      _
    %v81 = vlaneseq
    %v82 = vand.u32 %v81, 127
    %v83 = vcvt.s32.f32 %v82
    %vm84 = vcmp.lt.f32.partialorder %v83, 32.0
    %v85 = vld [vmem:[#allocation2] sm:$0xf]
    %v86 = vld [vmem:[#allocation5] sm:$0xf]
    %v87 = vld [vmem:[#allocation5 + $0x4] sm:$0xf]
    %v88 = vld [vmem:[#allocation5 + $0x8] sm:$0xf]
    %v89 = vld [vmem:[#allocation5 + $0xc] sm:$0xf]
    %v90 = vld [vmem:[#allocation5 + $0x10] sm:$0xf]
    %v91 = vld [vmem:[#allocation5 + $0x14] sm:$0xf]
    %v92 = vld [vmem:[#allocation5 + $0x18] sm:$0xf]
    %v93 = vld [vmem:[#allocation5 + $0x1c] sm:$0xf]
    %v94 = vld [vmem:[#allocation5 + $0x20] sm:$0xf]
    %v95 = vld [vmem:[#allocation5 + $0x24] sm:$0xf]
    %v96 = vld [vmem:[#allocation5 + $0x28] sm:$0xf]
    %v97 = vld [vmem:[#allocation5 + $0x2c] sm:$0xf]
    %v98 = vld [vmem:[#allocation5 + $0x30] sm:$0xf]
    %v99 = vld [vmem:[#allocation5 + $0x34] sm:$0xf]
    %v100 = vld [vmem:[#allocation5 + $0x38] sm:$0xf]
    %v101 = vld [vmem:[#allocation5 + $0x3c] sm:$0xf]
    %v102 = vld [vmem:[%s2] sm:$0x1]
    %v104 = vlaneseq
    %v105 = vshrl.u32 %v104, 7
    %v106 = vsub.s32 0, %v105
    %v107 = vrot.slane %v102, %v106
    %v125 = vunpack.c.l.b16 %v86
    %v126 = vunpack.c.l.b16 %v87
    %v127 = vunpack.c.l.b16 %v88
    %v128 = vunpack.c.l.b16 %v89
    %v129 = vunpack.c.l.b16 %v90
    %v130 = vunpack.c.l.b16 %v91
    %v131 = vunpack.c.l.b16 %v92
    %v132 = vunpack.c.l.b16 %v93
    %v133 = vunpack.c.l.b16 %v94
    %v134 = vunpack.c.l.b16 %v95
    %v135 = vunpack.c.l.b16 %v96
    %v136 = vunpack.c.l.b16 %v97
    %v137 = vunpack.c.l.b16 %v98
    %v138 = vunpack.c.l.b16 %v99
    %v139 = vunpack.c.l.b16 %v100
    %v140 = vunpack.c.l.b16 %v101
    %v141 = vpack.c.b16 %v126, %v125
    %v142 = vpack.c.b16 %v128, %v127
    %v143 = vpack.c.b16 %v130, %v129
    %v144 = vpack.c.b16 %v132, %v131
    %v145 = vpack.c.b16 %v134, %v133
    %v146 = vpack.c.b16 %v136, %v135
    %v147 = vpack.c.b16 %v138, %v137
    %v148 = vpack.c.b16 %v140, %v139
    %157 = vmatprep.subr.bf16.mxu0 0
    %158 = vmatpush1.bf16.msra.mxu0 %v141
    %159 = vmatprep.subr.bf16.mxu0 0
    %160 = vmatpush1.bf16.msra.mxu0 %v142
    %161 = vmatprep.subr.bf16.mxu0 0
    %162 = vmatpush1.bf16.msra.mxu0 %v143
    %163 = vmatprep.subr.bf16.mxu0 0
    %164 = vmatpush1.bf16.msra.mxu0 %v144
    %165 = vmatprep.subr.bf16.mxu0 0
    %166 = vmatpush1.bf16.msra.mxu0 %v145
    %167 = vmatprep.subr.bf16.mxu0 0
    %168 = vmatpush1.bf16.msra.mxu0 %v146
    %169 = vmatprep.subr.bf16.mxu0 0
    %170 = vmatpush1.bf16.msra.mxu0 %v147
    %171 = vmatprep.subr.bf16.mxu0 0
    %172 = vmatpush1.bf16.msra.mxu0 %v148
    %173 = vmatprep.subr.bf16.mxu0 0
    %174 = vmatpush1.bf16.msra.mxu0 0
    %175 = vmatprep.subr.bf16.mxu0 0
    %176 = vmatpush1.bf16.msra.mxu0 0
    %177 = vmatprep.subr.bf16.mxu0 0
    %178 = vmatpush1.bf16.msra.mxu0 0
    %179 = vmatprep.subr.bf16.mxu0 0
    %180 = vmatpush1.bf16.msra.mxu0 0
    %181 = vmatprep.subr.bf16.mxu0 0
    %182 = vmatpush1.bf16.msra.mxu0 0
    %183 = vmatprep.subr.bf16.mxu0 0
    %184 = vmatpush1.bf16.msra.mxu0 0
    %185 = vmatprep.subr.bf16.mxu0 0
    %186 = vmatpush1.bf16.msra.mxu0 0
    %187 = vmatprep.subr.bf16.mxu0 0
    %188 = vmatpush1.bf16.msra.mxu0 0
    %189 = vmatprep.mubr.bf16.mxu0 0
    %190 = vmatmul.mubr.bf16.gmra.mrb[0].mxu0 %v85
    %v191 = vpop.f32.mrb[0].mxu0
    %v192 = vadd.f32 %v107, %v191
    %v193 = vpop.f32.mrb[0].mxu0
    %v194 = vpop.f32.mrb[0].mxu0
    %v195 = vpop.f32.mrb[0].mxu0
    %196 = vdwg.mxu0
    %197 = vadd.xlane.f32.xlu0 %v192
    %v198 = vpop.xlane.xlu0 %197
    %v199 = vmul.f32 %v192, %v192
    %200 = vadd.xlane.f32.xlu0 %v199
    %v201 = vpop.xlane.xlu0 %200
    %v202 = vmul.f32 %v198, 0.03125
    %v203 = vmul.f32 %v201, 0.03125
    %v204 = vmul.f32 %v202, %v202
    %v205 = vsub.f32 %v203, %v204
    %v206 = vmax.f32 %v205, 0.0
    %v207 = vsub.f32 %v192, %v202
    %v208 = vadd.f32 %v206, 1e-05
    %v209 = vrsqrt.pop %v208
    %v210 = vmul.f32 %v207, %v209
    %v211 = vmax.f32 %v210, 0.0
    %v212 = vsel %vm84, 1, 0
    %vm213 = vcmp.eq.s32.totalorder %v212, 1
    %v214 = vsel %vm213, %v211, 0.0
    %v215 = vpack.c.bf16 %v214, %v214
    %v216 = vld [vmem:[#allocation7] sm:$0xf]
    %v217 = vld [vmem:[#allocation7 + $0x4] sm:$0xf]
    %v218 = vld [vmem:[#allocation7 + $0x8] sm:$0xf]
    %v219 = vld [vmem:[#allocation7 + $0xc] sm:$0xf]
    %v220 = vld [vmem:[#allocation7 + $0x10] sm:$0xf]
    %v221 = vld [vmem:[#allocation7 + $0x14] sm:$0xf]
    %v222 = vld [vmem:[#allocation7 + $0x18] sm:$0xf]
    %v223 = vld [vmem:[#allocation7 + $0x1c] sm:$0xf]
    %v224 = vld [vmem:[#allocation7 + $0x20] sm:$0xf]
    %v225 = vld [vmem:[#allocation7 + $0x24] sm:$0xf]
    %v226 = vld [vmem:[#allocation7 + $0x28] sm:$0xf]
    %v227 = vld [vmem:[#allocation7 + $0x2c] sm:$0xf]
    %v228 = vld [vmem:[#allocation7 + $0x30] sm:$0xf]
    %v229 = vld [vmem:[#allocation7 + $0x34] sm:$0xf]
    %v230 = vld [vmem:[#allocation7 + $0x38] sm:$0xf]
    %v231 = vld [vmem:[#allocation7 + $0x3c] sm:$0xf]
    %v232 = vld [vmem:[%s4] sm:$0x1]
    %v234 = vlaneseq
    %v235 = vshrl.u32 %v234, 7
    %v236 = vsub.s32 0, %v235
    %v237 = vrot.slane %v232, %v236
    %v255 = vunpack.c.l.b16 %v216
    %v256 = vunpack.c.l.b16 %v217
    %v257 = vunpack.c.l.b16 %v218
    %v258 = vunpack.c.l.b16 %v219
    %v259 = vunpack.c.l.b16 %v220
    %v260 = vunpack.c.l.b16 %v221
    %v261 = vunpack.c.l.b16 %v222
    %v262 = vunpack.c.l.b16 %v223
    %v263 = vunpack.c.l.b16 %v224
    %v264 = vunpack.c.l.b16 %v225
    %v265 = vunpack.c.l.b16 %v226
    %v266 = vunpack.c.l.b16 %v227
    %v267 = vunpack.c.l.b16 %v228
    %v268 = vunpack.c.l.b16 %v229
    %v269 = vunpack.c.l.b16 %v230
    %v270 = vunpack.c.l.b16 %v231
    %v271 = vpack.c.b16 %v256, %v255
    %v272 = vpack.c.b16 %v258, %v257
    %v273 = vpack.c.b16 %v260, %v259
    %v274 = vpack.c.b16 %v262, %v261
    %v275 = vpack.c.b16 %v264, %v263
    %v276 = vpack.c.b16 %v266, %v265
    %v277 = vpack.c.b16 %v268, %v267
    %v278 = vpack.c.b16 %v270, %v269
    %287 = vmatprep.subr.bf16.mxu0 0
    %288 = vmatpush1.bf16.msra.mxu0 %v271
    %289 = vmatprep.subr.bf16.mxu0 0
    %290 = vmatpush1.bf16.msra.mxu0 %v272
    %291 = vmatprep.subr.bf16.mxu0 0
    %292 = vmatpush1.bf16.msra.mxu0 %v273
    %293 = vmatprep.subr.bf16.mxu0 0
    %294 = vmatpush1.bf16.msra.mxu0 %v274
    %295 = vmatprep.subr.bf16.mxu0 0
    %296 = vmatpush1.bf16.msra.mxu0 %v275
    %297 = vmatprep.subr.bf16.mxu0 0
    %298 = vmatpush1.bf16.msra.mxu0 %v276
    %299 = vmatprep.subr.bf16.mxu0 0
    %300 = vmatpush1.bf16.msra.mxu0 %v277
    %301 = vmatprep.subr.bf16.mxu0 0
    %302 = vmatpush1.bf16.msra.mxu0 %v278
    %303 = vmatprep.subr.bf16.mxu0 0
    %304 = vmatpush1.bf16.msra.mxu0 0
    %305 = vmatprep.subr.bf16.mxu0 0
    %306 = vmatpush1.bf16.msra.mxu0 0
    %307 = vmatprep.subr.bf16.mxu0 0
    %308 = vmatpush1.bf16.msra.mxu0 0
    %309 = vmatprep.subr.bf16.mxu0 0
    %310 = vmatpush1.bf16.msra.mxu0 0
    %311 = vmatprep.subr.bf16.mxu0 0
    %312 = vmatpush1.bf16.msra.mxu0 0
    %313 = vmatprep.subr.bf16.mxu0 0
    %314 = vmatpush1.bf16.msra.mxu0 0
    %315 = vmatprep.subr.bf16.mxu0 0
    %316 = vmatpush1.bf16.msra.mxu0 0
    %317 = vmatprep.subr.bf16.mxu0 0
    %318 = vmatpush1.bf16.msra.mxu0 0
    %319 = vmatprep.mubr.bf16.mxu0 0
    %320 = vmatmul.mubr.bf16.gmra.mrb[0].mxu0 %v215
    %v321 = vpop.f32.mrb[0].mxu0
    %v322 = vadd.f32 %v237, %v321
    %v323 = vpop.f32.mrb[0].mxu0
    %v324 = vpop.f32.mrb[0].mxu0
    %v325 = vpop.f32.mrb[0].mxu0
    %326 = vdwg.mxu0
    %327 = vadd.xlane.f32.xlu0 %v322
    %v328 = vpop.xlane.xlu0 %327
    %v329 = vmul.f32 %v322, %v322
    %330 = vadd.xlane.f32.xlu0 %v329
    %v331 = vpop.xlane.xlu0 %330
    %v332 = vmul.f32 %v328, 0.03125
    %v333 = vmul.f32 %v331, 0.03125
    %v334 = vmul.f32 %v332, %v332
    %v335 = vsub.f32 %v333, %v334
    %v336 = vmax.f32 %v335, 0.0
    %v337 = vsub.f32 %v322, %v332
    %v338 = vadd.f32 %v336, 1e-05
    %v339 = vrsqrt.pop %v338
    %v340 = vmul.f32 %v337, %v339
    %v341 = vmax.f32 %v340, 0.0
    %v342 = vsel %vm213, %v341, 0.0
    %v343 = vpack.c.bf16 %v342, %v342
    %s344 = scalar_lea.vmem [#allocation7], 64
    %v345 = vld [vmem:[%s344] sm:$0xf]
    %v346 = vld [vmem:[%s344 + $0x4] sm:$0xf]
    %v347 = vld [vmem:[%s344 + $0x8] sm:$0xf]
    %v348 = vld [vmem:[%s344 + $0xc] sm:$0xf]
    %v349 = vld [vmem:[%s344 + $0x10] sm:$0xf]
    %v350 = vld [vmem:[%s344 + $0x14] sm:$0xf]
    %v351 = vld [vmem:[%s344 + $0x18] sm:$0xf]
    %v352 = vld [vmem:[%s344 + $0x1c] sm:$0xf]
    %v353 = vld [vmem:[%s344 + $0x20] sm:$0xf]
    %v354 = vld [vmem:[%s344 + $0x24] sm:$0xf]
    %v355 = vld [vmem:[%s344 + $0x28] sm:$0xf]
    %v356 = vld [vmem:[%s344 + $0x2c] sm:$0xf]
    %v357 = vld [vmem:[%s344 + $0x30] sm:$0xf]
    %v358 = vld [vmem:[%s344 + $0x34] sm:$0xf]
    %v359 = vld [vmem:[%s344 + $0x38] sm:$0xf]
    %v360 = vld [vmem:[%s344 + $0x3c] sm:$0xf]
    %s361 = scalar_lea.vmem %s4, 1
    %v362 = vld [vmem:[%s361] sm:$0x1]
    %v364 = vlaneseq
    %v365 = vshrl.u32 %v364, 7
    %v366 = vsub.s32 0, %v365
    %v367 = vrot.slane %v362, %v366
    %v385 = vunpack.c.l.b16 %v345
    %v386 = vunpack.c.l.b16 %v346
    %v387 = vunpack.c.l.b16 %v347
    %v388 = vunpack.c.l.b16 %v348
    %v389 = vunpack.c.l.b16 %v349
    %v390 = vunpack.c.l.b16 %v350
    %v391 = vunpack.c.l.b16 %v351
    %v392 = vunpack.c.l.b16 %v352
    %v393 = vunpack.c.l.b16 %v353
    %v394 = vunpack.c.l.b16 %v354
    %v395 = vunpack.c.l.b16 %v355
    %v396 = vunpack.c.l.b16 %v356
    %v397 = vunpack.c.l.b16 %v357
    %v398 = vunpack.c.l.b16 %v358
    %v399 = vunpack.c.l.b16 %v359
    %v400 = vunpack.c.l.b16 %v360
    %v401 = vpack.c.b16 %v386, %v385
    %v402 = vpack.c.b16 %v388, %v387
    %v403 = vpack.c.b16 %v390, %v389
    %v404 = vpack.c.b16 %v392, %v391
    %v405 = vpack.c.b16 %v394, %v393
    %v406 = vpack.c.b16 %v396, %v395
    %v407 = vpack.c.b16 %v398, %v397
    %v408 = vpack.c.b16 %v400, %v399
    %417 = vmatprep.subr.bf16.mxu0 0
    %418 = vmatpush1.bf16.msra.mxu0 %v401
    %419 = vmatprep.subr.bf16.mxu0 0
    %420 = vmatpush1.bf16.msra.mxu0 %v402
    %421 = vmatprep.subr.bf16.mxu0 0
    %422 = vmatpush1.bf16.msra.mxu0 %v403
    %423 = vmatprep.subr.bf16.mxu0 0
    %424 = vmatpush1.bf16.msra.mxu0 %v404
    %425 = vmatprep.subr.bf16.mxu0 0
    %426 = vmatpush1.bf16.msra.mxu0 %v405
    %427 = vmatprep.subr.bf16.mxu0 0
    %428 = vmatpush1.bf16.msra.mxu0 %v406
    %429 = vmatprep.subr.bf16.mxu0 0
    %430 = vmatpush1.bf16.msra.mxu0 %v407
    %431 = vmatprep.subr.bf16.mxu0 0
    %432 = vmatpush1.bf16.msra.mxu0 %v408
    %433 = vmatprep.subr.bf16.mxu0 0
    %434 = vmatpush1.bf16.msra.mxu0 0
    %435 = vmatprep.subr.bf16.mxu0 0
    %436 = vmatpush1.bf16.msra.mxu0 0
    %437 = vmatprep.subr.bf16.mxu0 0
    %438 = vmatpush1.bf16.msra.mxu0 0
    %439 = vmatprep.subr.bf16.mxu0 0
    %440 = vmatpush1.bf16.msra.mxu0 0
    %441 = vmatprep.subr.bf16.mxu0 0
    %442 = vmatpush1.bf16.msra.mxu0 0
    %443 = vmatprep.subr.bf16.mxu0 0
    %444 = vmatpush1.bf16.msra.mxu0 0
    %445 = vmatprep.subr.bf16.mxu0 0
    %446 = vmatpush1.bf16.msra.mxu0 0
    %447 = vmatprep.subr.bf16.mxu0 0
    %448 = vmatpush1.bf16.msra.mxu0 0
    %449 = vmatprep.mubr.bf16.mxu0 0
    %450 = vmatmul.mubr.bf16.gmra.mrb[0].mxu0 %v343
    %v451 = vpop.f32.mrb[0].mxu0
    %v452 = vadd.f32 %v367, %v451
    %v453 = vpop.f32.mrb[0].mxu0
    %v454 = vpop.f32.mrb[0].mxu0
    %v455 = vpop.f32.mrb[0].mxu0
    %456 = vdwg.mxu0
    %457 = vadd.xlane.f32.xlu0 %v452
    %v458 = vpop.xlane.xlu0 %457
    %v459 = vmul.f32 %v452, %v452
    %460 = vadd.xlane.f32.xlu0 %v459
    %v461 = vpop.xlane.xlu0 %460
    %v462 = vmul.f32 %v458, 0.03125
    %v463 = vmul.f32 %v461, 0.03125
    %v464 = vmul.f32 %v462, %v462
    %v465 = vsub.f32 %v463, %v464
    %v466 = vmax.f32 %v465, 0.0
    %v467 = vsub.f32 %v452, %v462
    %v468 = vadd.f32 %v466, 1e-05
    %v469 = vrsqrt.pop %v468
    %v470 = vmul.f32 %v467, %v469
    %v471 = vmax.f32 %v470, 0.0
    %v472 = vsel %vm213, %v471, 0.0
    %v473 = vpack.c.bf16 %v472, %v472
    %v474 = vld [vmem:[#allocation8] sm:$0xf]
    %v475 = vld [vmem:[#allocation8 + $0x4] sm:$0xf]
    %v476 = vld [vmem:[#allocation8 + $0x8] sm:$0xf]
    %v477 = vld [vmem:[#allocation8 + $0xc] sm:$0xf]
    %v478 = vld [vmem:[#allocation8 + $0x10] sm:$0xf]
    %v479 = vld [vmem:[#allocation8 + $0x14] sm:$0xf]
    %v480 = vld [vmem:[#allocation8 + $0x18] sm:$0xf]
    %v481 = vld [vmem:[#allocation8 + $0x1c] sm:$0xf]
    %v482 = vld [vmem:[#allocation8 + $0x20] sm:$0xf]
    %v483 = vld [vmem:[#allocation8 + $0x24] sm:$0xf]
    %v484 = vld [vmem:[#allocation8 + $0x28] sm:$0xf]
    %v485 = vld [vmem:[#allocation8 + $0x2c] sm:$0xf]
    %v486 = vld [vmem:[#allocation8 + $0x30] sm:$0xf]
    %v487 = vld [vmem:[#allocation8 + $0x34] sm:$0xf]
    %v488 = vld [vmem:[#allocation8 + $0x38] sm:$0xf]
    %v489 = vld [vmem:[#allocation8 + $0x3c] sm:$0xf]
    %v490 = vld [vmem:[%s6] sm:$0x1]
    %v492 = vlaneseq
    %v493 = vshrl.u32 %v492, 7
    %v494 = vsub.s32 0, %v493
    %v495 = vrot.slane %v490, %v494
    %v513 = vunpack.c.l.b16 %v474
    %v514 = vunpack.c.l.b16 %v475
    %v515 = vunpack.c.l.b16 %v476
    %v516 = vunpack.c.l.b16 %v477
    %v517 = vunpack.c.l.b16 %v478
    %v518 = vunpack.c.l.b16 %v479
    %v519 = vunpack.c.l.b16 %v480
    %v520 = vunpack.c.l.b16 %v481
    %v521 = vunpack.c.l.b16 %v482
    %v522 = vunpack.c.l.b16 %v483
    %v523 = vunpack.c.l.b16 %v484
    %v524 = vunpack.c.l.b16 %v485
    %v525 = vunpack.c.l.b16 %v486
    %v526 = vunpack.c.l.b16 %v487
    %v527 = vunpack.c.l.b16 %v488
    %v528 = vunpack.c.l.b16 %v489
    %v529 = vpack.c.b16 %v514, %v513
    %v530 = vpack.c.b16 %v516, %v515
    %v531 = vpack.c.b16 %v518, %v517
    %v532 = vpack.c.b16 %v520, %v519
    %v533 = vpack.c.b16 %v522, %v521
    %v534 = vpack.c.b16 %v524, %v523
    %v535 = vpack.c.b16 %v526, %v525
    %v536 = vpack.c.b16 %v528, %v527
    %545 = vmatprep.subr.bf16.mxu0 0
    %546 = vmatpush1.bf16.msra.mxu0 %v529
    %547 = vmatprep.subr.bf16.mxu0 0
    %548 = vmatpush1.bf16.msra.mxu0 %v530
    %549 = vmatprep.subr.bf16.mxu0 0
    %550 = vmatpush1.bf16.msra.mxu0 %v531
    %551 = vmatprep.subr.bf16.mxu0 0
    %552 = vmatpush1.bf16.msra.mxu0 %v532
    %553 = vmatprep.subr.bf16.mxu0 0
    %554 = vmatpush1.bf16.msra.mxu0 %v533
    %555 = vmatprep.subr.bf16.mxu0 0
    %556 = vmatpush1.bf16.msra.mxu0 %v534
    %557 = vmatprep.subr.bf16.mxu0 0
    %558 = vmatpush1.bf16.msra.mxu0 %v535
    %559 = vmatprep.subr.bf16.mxu0 0
    %560 = vmatpush1.bf16.msra.mxu0 %v536
    %561 = vmatprep.subr.bf16.mxu0 0
    %562 = vmatpush1.bf16.msra.mxu0 0
    %563 = vmatprep.subr.bf16.mxu0 0
    %564 = vmatpush1.bf16.msra.mxu0 0
    %565 = vmatprep.subr.bf16.mxu0 0
    %566 = vmatpush1.bf16.msra.mxu0 0
    %567 = vmatprep.subr.bf16.mxu0 0
    %568 = vmatpush1.bf16.msra.mxu0 0
    %569 = vmatprep.subr.bf16.mxu0 0
    %570 = vmatpush1.bf16.msra.mxu0 0
    %571 = vmatprep.subr.bf16.mxu0 0
    %572 = vmatpush1.bf16.msra.mxu0 0
    %573 = vmatprep.subr.bf16.mxu0 0
    %574 = vmatpush1.bf16.msra.mxu0 0
    %575 = vmatprep.subr.bf16.mxu0 0
    %576 = vmatpush1.bf16.msra.mxu0 0
    %577 = vmatprep.mubr.bf16.mxu0 0
    %578 = vmatmul.mubr.bf16.gmra.mrb[0].mxu0 %v473
    %v579 = vpop.f32.mrb[0].mxu0
    %v580 = vadd.f32 %v495, %v579
    %v581 = vpop.f32.mrb[0].mxu0
    %v582 = vpop.f32.mrb[0].mxu0
    %v583 = vpop.f32.mrb[0].mxu0
    %584 = vdwg.mxu0
    %585 = vst [vmem:[#allocation10] sm:$0xff] %v580
    // Predicated region
    $region46: #{tpu_custom_call.1} parent=1 // pred_check
      _
    $region47: #{tpu_custom_call.1} parent=1 // pred_check_branch
      %587 = sbr.rel (0) target = $region49
    $region48: #{tpu_custom_call.1} parent=1 // pred_region
      %s589 = ssub.s32 128, 128
      %590 = vsyncadd [#allocation4], %s589
      %s592 = sshll.u32 [#allocation10], 4
      %s593 = int_to_ptr.vmem [resolvable:$true] %s592
      %595 = dma.vmem_to_hbm [thread:$0]  %s593, 128, %s7, [#allocation4]
    $region49: #{tpu_custom_call.1} parent=1 // pred_fallthru
      _
    // Predicated region
    $region50: #{tpu_custom_call.1} parent=1 // pred_check
      _
    $region51: #{tpu_custom_call.1} parent=1 // pred_check_branch
      %597 = sbr.rel (0) target = $region53
    $region52: #{tpu_custom_call.1} parent=1 // pred_region
      %598 = dma.done [#allocation4], 128
    $region53: #{tpu_custom_call.1} parent=1 // pred_fallthru
      _
    %599 = vsyncpa [#allocation3], 1
    %600 = vsyncpa [#allocation6], 1
    %601 = vsyncpa [#allocation9], 1
    %602 = vsyncpa [#allocation4], 1

</llo_original>
